<compile_context>
chip_gen: v7x
topology: tpu7x:2x2x1
jax: 0.10.0
libtpu: 0.0.40
codegen_flags: <defaults>
</compile_context>

<pallas_src>
import functools

import jax
import jax.numpy as jnp
from jax.experimental import pallas as pl
from jax.experimental.pallas import tpu as pltpu


def _vmem_budget_bytes():
    """~70% of physical per-core VMEM; conservative 64 MiB if unqueryable."""
    cap = 64 << 20
    try:
        info = pltpu.get_tpu_info()
        cap = int(getattr(info, "vmem_capacity_bytes", cap))
    except Exception:
        pass
    return int(0.7 * cap)


def _ca_kernel(x_ref, w1t_ref, b1_ref, w2_ref, b2_ref, o_ref,
               sum_ref, scale_ref, *, inv_hw, hw, ragged):
    # x_ref : (1, C, THW)    w1t_ref: (C, Cr)   b1_ref: (1, Cr)
    # w2_ref: (C, Cr)        b2_ref : (C, 1)    o_ref : (1, C, THW)
    # sum_ref  : (C, 1) f32 scratch (running per-channel sum, persists over t)
    # scale_ref: (C, 1) out-dtype scratch (sigmoid scale, cast once)
    phase = pl.program_id(1)
    t = pl.program_id(2)
    nt = pl.num_programs(2)
    tile = x_ref.shape[-1]

    # ---- phase 0: global average pool + (last tile) squeeze/excite MLP ----
    @pl.when(phase == 0)
    def _():
        @pl.when(t == 0)
        def _():
            sum_ref[...] = jnp.zeros_like(sum_ref)

        xt = x_ref[0]                                            # (C, tile)
        if ragged:
            # The last block overhangs HW; OOB lanes are undefined -> mask.
            lane = jax.lax.broadcasted_iota(jnp.int32, xt.shape, 1)
            xt = jnp.where(t * tile + lane < hw, xt, jnp.zeros_like(xt))
        # Per-channel partial sum of this tile, accumulated in exact f32.
        # (The per-tile lane reduce is XLU work fully hidden under HBM DMA.)
        sum_ref[...] += jnp.sum(xt, axis=-1, keepdims=True, dtype=jnp.float32)

        @pl.when(t == nt - 1)
        def _():
            pooled = sum_ref[...] * inv_hw                       # (C, 1) f32
            # conv1x1 #1 (C -> Cr) + ReLU, reshape/transpose-free:
            #   y1[r] = sum_c W1[r, c] * pooled[c]   (W1 passed as (C, Cr))
            y1 = jnp.sum(w1t_ref[...] * pooled, axis=0, keepdims=True)
            y1 = jnp.maximum(y1 + b1_ref[...], 0.0)              # (1, Cr)
            # conv1x1 #2 (Cr -> C) + sigmoid:
            #   y2[c] = sum_r W2[c, r] * y1[r]
            y2 = jnp.sum(w2_ref[...] * y1, axis=1, keepdims=True)
            # Pre-cast so the phase-1 inner loop is pure vld / vmul / vst.
            # (Non-f32 x: the scale is applied in x's dtype, matching a
            #  PyTorch module run end-to-end in that dtype.)
            scale_ref[...] = jax.nn.sigmoid(y2 + b2_ref[...]).astype(scale_ref.dtype)

    # ---- phase 1: apply the channel scale; output block written once ------
    @pl.when(phase == 1)
    def _():
        o_ref[0] = x_ref[0] * scale_ref[...]


def ca_layer(x, w1, b1, w2, b2, *, tile_hw=None, alias_x=False):
    """Channel-attention forward.  x: (B, C, H, W) NCHW, w1: (Cr, C), w2: (C, Cr)."""
    B, C, H, W = x.shape
    Cr = w1.shape[0]
    HW = H * W
    itemsize = x.dtype.itemsize
    LANE = 128

    budget = _vmem_budget_bytes()
    head = 2 << 20                        # params + scratch + misc headroom
    slab_bytes = C * HW * itemsize        # one batch element's spatial slab

    if tile_hw is None:
        if 4 * slab_bytes + head <= budget:
            # Single resident tile (nt == 1): x is fetched once and reused
            # for phase 1, so HBM traffic is 1 read + 1 write of x.
            tile_hw = HW
        else:
            # 2-8 MiB lane-dense blocks; 4 blocks (x + out, double-buffered)
            # plus headroom must fit the per-generation VMEM budget.
            target = min(8 << 20, max(2 << 20, (budget - head) // 5))
            tile_hw = target // max(1, C * itemsize)

    if tile_hw >= HW:
        tile_hw = HW                      # full-extent block (no 128 constraint)
    else:
        tile_hw = max(LANE, (int(tile_hw) // LANE) * LANE)
    nt = pl.cdiv(HW, tile_hw)
    ragged = (nt > 1) and (HW % tile_hw != 0)

    x_flat = x.reshape(B, C, HW)          # metadata-only reshape (no pad copy)

    # Parameters laid out so the kernel never reshapes / transposes.
    w1_t = jnp.asarray(w1, jnp.float32).T            # (C, Cr)
    b1_row = jnp.asarray(b1, jnp.float32).reshape(1, Cr)
    w2_m = jnp.asarray(w2, jnp.float32)              # (C, Cr)
    b2_col = jnp.asarray(b2, jnp.float32).reshape(C, 1)

    kernel = functools.partial(_ca_kernel, inv_hw=1.0 / float(HW),
                               hw=HW, ragged=ragged)

    # VMEM: x + out blocks double-buffered, plus small params/scratch.
    block_bytes = C * tile_hw * itemsize
    vmem_limit = int(min(max(4 * block_bytes + head, 16 << 20), budget))

    out = pl.pallas_call(
        kernel,
        out_shape=jax.ShapeDtypeStruct((B, C, HW), x.dtype),
        grid_spec=pltpu.PrefetchScalarGridSpec(
            num_scalar_prefetch=0,
            grid=(B, 2, nt),                                    # batch, phase, hw tile
            in_specs=[
                pl.BlockSpec((1, C, tile_hw), lambda b, p, t: (b, 0, t)),  # x
                pl.BlockSpec((C, Cr), lambda b, p, t: (0, 0)),             # W1^T
                pl.BlockSpec((1, Cr), lambda b, p, t: (0, 0)),             # b1
                pl.BlockSpec((C, Cr), lambda b, p, t: (0, 0)),             # W2
                pl.BlockSpec((C, 1), lambda b, p, t: (0, 0)),              # b2
            ],
            # Freeze the output block index during phase 0 (p == 0) so the
            # block stays resident and is written back exactly once after the
            # unconditional phase-1 store fills it (do NOT make that store
            # conditional/partial).
            out_specs=pl.BlockSpec((1, C, tile_hw),
                                   lambda b, p, t: (b, 0, p * t)),
            scratch_shapes=[
                pltpu.VMEM((C, 1), jnp.float32),   # per-channel running sums
                pltpu.VMEM((C, 1), x.dtype),       # sigmoid scale (out dtype)
            ],
        ),
        compiler_params=pltpu.CompilerParams(
            dimension_semantics=("parallel", "arbitrary", "arbitrary"),
            vmem_limit_bytes=vmem_limit,
        ),
        # Optional in-place update (saves one HBM buffer when stacking many
        # CALayers, e.g. RCAN); safe because every tile of batch b is fully
        # read in both phases before its output block is written back.
        input_output_aliases=({0: 0} if alias_x else {}),
    )(x_flat, w1_t, b1_row, w2_m, b2_col)

    # TODO(synk): for B == 1 on v7x, shard the hw-tile axis across the two
    # TensorCores (per-core partial sums combined via shared memory +
    # core_barrier) instead of relying on the batch-parallel axis.
    return out.reshape(B, C, H, W)


def ca_layer_ref(x, w1, b1, w2, b2):
    """Pure-JAX reference identical to the PyTorch module semantics."""
    hp = jax.lax.Precision.HIGHEST
    y = jnp.mean(x, axis=(2, 3), keepdims=True)                 # (B, C, 1, 1)
    y = jnp.einsum('rc,bcij->brij', w1, y, precision=hp) + b1[None, :, None, None]
    y = jnp.maximum(y, 0.0)
    y = jnp.einsum('cr,brij->bcij', w2, y, precision=hp) + b2[None, :, None, None]
    y = jax.nn.sigmoid(y)
    return x * y


if __name__ == "__main__":
    key = jax.random.PRNGKey(0)
    kx, k1, k2, k3, k4, kx2 = jax.random.split(key, 6)

    # Small shapes consistent with the module (channels divisible by reduction).
    B, C, H, W = 2, 32, 16, 16
    reduction = 16
    Cr = C // reduction  # = 2

    x = jax.random.normal(kx, (B, C, H, W), dtype=jnp.float32)
    w1 = jax.random.normal(k1, (Cr, C), dtype=jnp.float32) * 0.2
    b1 = jax.random.normal(k2, (Cr,), dtype=jnp.float32) * 0.1
    w2 = jax.random.normal(k3, (C, Cr), dtype=jnp.float32) * 0.2
    b2 = jax.random.normal(k4, (C,), dtype=jnp.float32) * 0.1

    # Path 1: single resident tile (nt == 1) — x read once, written once.
    out = jax.block_until_ready(ca_layer(x, w1, b1, w2, b2))
    ref = jax.block_until_ready(ca_layer_ref(x, w1, b1, w2, b2))
    assert out.shape == x.shape
    assert jnp.allclose(out, ref, atol=1e-5, rtol=1e-5), "mismatch vs reference"

    # Path 2: forced multi-tile grid with a ragged (non-128-multiple) last
    # block — exercises the in-kernel lane mask and Pallas' masked store.
    x2 = jax.random.normal(kx2, (B, C, 20, 20), dtype=jnp.float32)
    out2 = jax.block_until_ready(ca_layer(x2, w1, b1, w2, b2, tile_hw=128))
    ref2 = jax.block_until_ready(ca_layer_ref(x2, w1, b1, w2, b2))
    assert out2.shape == x2.shape
    assert jnp.allclose(out2, ref2, atol=1e-5, rtol=1e-5), "mismatch (tiled) vs reference"

    print("KERNEL_OK")
</pallas_src>

<mosaic_0001>
module attributes {stable_mosaic.version = 11 : i64} {
  func.func @_ca_kernel(%arg0: i32, %arg1: i32, %arg2: i32, %arg3: memref<1x32x256xf32, #tpu.memory_space<vmem>>, %arg4: memref<32x2xf32, #tpu.memory_space<vmem>>, %arg5: memref<1x2xf32, #tpu.memory_space<vmem>>, %arg6: memref<32x2xf32, #tpu.memory_space<vmem>>, %arg7: memref<32x1xf32, #tpu.memory_space<vmem>>, %arg8: memref<1x32x256xf32, #tpu.memory_space<vmem>>, %arg9: memref<32x1xf32, #tpu.memory_space<vmem>>, %arg10: memref<32x1xf32, #tpu.memory_space<vmem>>) attributes {dimension_semantics = [#tpu.dimension_semantics<parallel>, #tpu.dimension_semantics<arbitrary>, #tpu.dimension_semantics<arbitrary>], iteration_bounds = array<i64: 2, 2, 1>, scalar_prefetch = 0 : i64, scratch_operands = 2 : i64, tpu.core_type = #tpu.core_type<tc>, window_params = [{transform_indices = @transform_0, window_bounds = array<i64: 1, 32, 256>}, {pipeline_mode = #tpu.pipeline_mode<synchronous>, transform_indices = @transform_1, window_bounds = array<i64: 32, 2>}, {pipeline_mode = #tpu.pipeline_mode<synchronous>, transform_indices = @transform_2, window_bounds = array<i64: 1, 2>}, {pipeline_mode = #tpu.pipeline_mode<synchronous>, transform_indices = @transform_3, window_bounds = array<i64: 32, 2>}, {pipeline_mode = #tpu.pipeline_mode<synchronous>, transform_indices = @transform_4, window_bounds = array<i64: 32, 1>}, {transform_indices = @transform_5, window_bounds = array<i64: 1, 32, 256>}]} {
    %c0_i32 = arith.constant 0 : i32
    %0 = arith.cmpi eq, %arg1, %c0_i32 : i32
    %1 = arith.extui %0 : i1 to i32
    %c0_i32_0 = arith.constant 0 : i32
    %2 = arith.cmpi ne, %1, %c0_i32_0 : i32
    scf.if %2 {
      %c0_i32_2 = arith.constant 0 : i32
      %6 = arith.cmpi eq, %arg2, %c0_i32_2 : i32
      %7 = arith.extui %6 : i1 to i32
      %c0_i32_3 = arith.constant 0 : i32
      %8 = arith.cmpi ne, %7, %c0_i32_3 : i32
      scf.if %8 {
        %cst_12 = arith.constant 0.000000e+00 : f32
        %19 = vector.broadcast %cst_12 : f32 to vector<32x1xf32>
        %c0_13 = arith.constant 0 : index
        %c0_14 = arith.constant 0 : index
        %20 = vector.load %arg9[%c0_13, %c0_14] : memref<32x1xf32, #tpu.memory_space<vmem>>, vector<32x1xf32>
        tpu.vector_store %arg9[%c0_13, %c0_14], %19 {strides = array<i32>} : memref<32x1xf32, #tpu.memory_space<vmem>>, vector<32x1xf32>,
      } else {
      }
      %c0 = arith.constant 0 : index
      %c0_4 = arith.constant 0 : index
      %c0_5 = arith.constant 0 : index
      %9 = vector.load %arg3[%c0, %c0_4, %c0_5] : memref<1x32x256xf32, #tpu.memory_space<vmem>>, vector<1x32x256xf32>
      %10 = vector.shape_cast %9 : vector<1x32x256xf32> to vector<32x256xf32>
      %c0_6 = arith.constant 0 : index
      %c0_7 = arith.constant 0 : index
      %11 = vector.load %arg9[%c0_6, %c0_7] : memref<32x1xf32, #tpu.memory_space<vmem>>, vector<32x1xf32>
      %cst = arith.constant dense<0.000000e+00> : vector<32xf32>
      %12 = vector.multi_reduction <add>, %10, %cst [1] : vector<32x256xf32> to vector<32xf32>
      %13 = vector.shape_cast %12 : vector<32xf32> to vector<32x1xf32>
      %14 = arith.addf %11, %13 : vector<32x1xf32>
      %c0_8 = arith.constant 0 : index
      %c0_9 = arith.constant 0 : index
      %15 = vector.load %arg9[%c0_8, %c0_9] : memref<32x1xf32, #tpu.memory_space<vmem>>, vector<32x1xf32>
      tpu.vector_store %arg9[%c0_8, %c0_9], %14 {strides = array<i32>} : memref<32x1xf32, #tpu.memory_space<vmem>>, vector<32x1xf32>,
      %c0_i32_10 = arith.constant 0 : i32
      %16 = arith.cmpi eq, %arg2, %c0_i32_10 : i32
      %17 = arith.extui %16 : i1 to i32
      %c0_i32_11 = arith.constant 0 : i32
      %18 = arith.cmpi ne, %17, %c0_i32_11 : i32
      scf.if %18 {
        %c0_12 = arith.constant 0 : index
        %c0_13 = arith.constant 0 : index
        %19 = vector.load %arg9[%c0_12, %c0_13] : memref<32x1xf32, #tpu.memory_space<vmem>>, vector<32x1xf32>
        %cst_14 = arith.constant 3.906250e-03 : f32
        %20 = vector.broadcast %cst_14 : f32 to vector<32x1xf32>
        %21 = arith.mulf %19, %20 : vector<32x1xf32>
        %c0_15 = arith.constant 0 : index
        %c0_16 = arith.constant 0 : index
        %22 = vector.load %arg4[%c0_15, %c0_16] : memref<32x2xf32, #tpu.memory_space<vmem>>, vector<32x2xf32>
        %23 = vector.broadcast %21 : vector<32x1xf32> to vector<32x2xf32>
        %24 = arith.mulf %22, %23 : vector<32x2xf32>
        %cst_17 = arith.constant dense<0.000000e+00> : vector<2xf32>
        %25 = vector.multi_reduction <add>, %24, %cst_17 [0] : vector<32x2xf32> to vector<2xf32>
        %26 = vector.shape_cast %25 : vector<2xf32> to vector<1x2xf32>
        %c0_18 = arith.constant 0 : index
        %c0_19 = arith.constant 0 : index
        %27 = vector.load %arg5[%c0_18, %c0_19] : memref<1x2xf32, #tpu.memory_space<vmem>>, vector<1x2xf32>
        %28 = arith.addf %26, %27 : vector<1x2xf32>
        %cst_20 = arith.constant 0.000000e+00 : f32
        %29 = vector.broadcast %cst_20 : f32 to vector<1x2xf32>
        %30 = arith.maximumf %28, %29 : vector<1x2xf32>
        %c0_21 = arith.constant 0 : index
        %c0_22 = arith.constant 0 : index
        %31 = vector.load %arg6[%c0_21, %c0_22] : memref<32x2xf32, #tpu.memory_space<vmem>>, vector<32x2xf32>
        %32 = vector.broadcast %30 : vector<1x2xf32> to vector<32x2xf32>
        %33 = arith.mulf %31, %32 : vector<32x2xf32>
        %cst_23 = arith.constant dense<0.000000e+00> : vector<32xf32>
        %34 = vector.multi_reduction <add>, %33, %cst_23 [1] : vector<32x2xf32> to vector<32xf32>
        %35 = vector.shape_cast %34 : vector<32xf32> to vector<32x1xf32>
        %c0_24 = arith.constant 0 : index
        %c0_25 = arith.constant 0 : index
        %36 = vector.load %arg7[%c0_24, %c0_25] : memref<32x1xf32, #tpu.memory_space<vmem>>, vector<32x1xf32>
        %37 = arith.addf %35, %36 : vector<32x1xf32>
        %38 = arith.negf %37 : vector<32x1xf32>
        %39 = math.exp %38 : vector<32x1xf32>
        %cst_26 = arith.constant 1.000000e+00 : f32
        %40 = vector.broadcast %cst_26 : f32 to vector<32x1xf32>
        %41 = arith.addf %40, %39 : vector<32x1xf32>
        %42 = arith.divf %40, %41 : vector<32x1xf32>
        %c0_27 = arith.constant 0 : index
        %c0_28 = arith.constant 0 : index
        %43 = vector.load %arg10[%c0_27, %c0_28] : memref<32x1xf32, #tpu.memory_space<vmem>>, vector<32x1xf32>
        tpu.vector_store %arg10[%c0_27, %c0_28], %42 {strides = array<i32>} : memref<32x1xf32, #tpu.memory_space<vmem>>, vector<32x1xf32>,
      } else {
      }
    } else {
    }
    %c1_i32 = arith.constant 1 : i32
    %3 = arith.cmpi eq, %arg1, %c1_i32 : i32
    %4 = arith.extui %3 : i1 to i32
    %c0_i32_1 = arith.constant 0 : i32
    %5 = arith.cmpi ne, %4, %c0_i32_1 : i32
    scf.if %5 {
      %c0 = arith.constant 0 : index
      %c0_2 = arith.constant 0 : index
      %c0_3 = arith.constant 0 : index
      %6 = vector.load %arg3[%c0, %c0_2, %c0_3] : memref<1x32x256xf32, #tpu.memory_space<vmem>>, vector<1x32x256xf32>
      %7 = vector.shape_cast %6 : vector<1x32x256xf32> to vector<32x256xf32>
      %c0_4 = arith.constant 0 : index
      %c0_5 = arith.constant 0 : index
      %8 = vector.load %arg10[%c0_4, %c0_5] : memref<32x1xf32, #tpu.memory_space<vmem>>, vector<32x1xf32>
      %9 = vector.broadcast %8 : vector<32x1xf32> to vector<32x256xf32>
      %10 = arith.mulf %7, %9 : vector<32x256xf32>
      %c0_6 = arith.constant 0 : index
      %c0_7 = arith.constant 0 : index
      %c0_8 = arith.constant 0 : index
      %11 = vector.load %arg8[%c0_6, %c0_7, %c0_8] : memref<1x32x256xf32, #tpu.memory_space<vmem>>, vector<1x32x256xf32>
      %12 = vector.shape_cast %11 : vector<1x32x256xf32> to vector<32x256xf32>
      %13 = vector.shape_cast %10 : vector<32x256xf32> to vector<1x32x256xf32>
      tpu.vector_store %arg8[%c0_6, %c0_7, %c0_8], %13 {strides = array<i32>} : memref<1x32x256xf32, #tpu.memory_space<vmem>>, vector<1x32x256xf32>,
    } else {
    }
    return
  }
  func.func @transform_0(%arg0: i32, %arg1: i32, %arg2: i32) -> (i32, i32, i32) {
    %c0_i32 = arith.constant 0 : i32
    %c0_i32_0 = arith.constant 0 : i32
    return %arg0, %c0_i32, %arg2 : i32, i32, i32
  }
  func.func @transform_1(%arg0: i32, %arg1: i32, %arg2: i32) -> (i32, i32) {
    %c0_i32 = arith.constant 0 : i32
    %c0_i32_0 = arith.constant 0 : i32
    %c0_i32_1 = arith.constant 0 : i32
    return %c0_i32, %c0_i32_0 : i32, i32
  }
  func.func @transform_2(%arg0: i32, %arg1: i32, %arg2: i32) -> (i32, i32) {
    %c0_i32 = arith.constant 0 : i32
    %c0_i32_0 = arith.constant 0 : i32
    %c0_i32_1 = arith.constant 0 : i32
    return %c0_i32, %c0_i32_0 : i32, i32
  }
  func.func @transform_3(%arg0: i32, %arg1: i32, %arg2: i32) -> (i32, i32) {
    %c0_i32 = arith.constant 0 : i32
    %c0_i32_0 = arith.constant 0 : i32
    %c0_i32_1 = arith.constant 0 : i32
    return %c0_i32, %c0_i32_0 : i32, i32
  }
  func.func @transform_4(%arg0: i32, %arg1: i32, %arg2: i32) -> (i32, i32) {
    %c0_i32 = arith.constant 0 : i32
    %c0_i32_0 = arith.constant 0 : i32
    %c0_i32_1 = arith.constant 0 : i32
    return %c0_i32, %c0_i32_0 : i32, i32
  }
  func.func @transform_5(%arg0: i32, %arg1: i32, %arg2: i32) -> (i32, i32, i32) {
    %0 = arith.muli %arg1, %arg2 : i32
    %c0_i32 = arith.constant 0 : i32
    %c0_i32_0 = arith.constant 0 : i32
    return %arg0, %c0_i32, %0 : i32, i32, i32
  }
}

</mosaic_0001>

<llo_original>
// kernel: tpu_custom_call.1
$region0: #{tpu_custom_call.1}
  #allocation0 [shape = 'u32[]', space=smem, size = 0x4, offset = 0x4, fixed_abs, tag = 'smem constant byte address 0x4 - core index']
  #allocation1 [shape = 'u32[144,128]{1,0:T(1,128)}', space=vmem, size = 0x12000, scoped, tag = 'internal scratch']
  #allocation2 [shape = 'f32[32,1]{1,0:T(8,128)}', space=vmem, size = 0x4000, scoped, tag = 'scratch operand']
  #allocation3 [shape = 'f32[32,1]{1,0:T(8,128)}', space=vmem, size = 0x4000, scoped, tag = 'scratch operand']
  %s0 = inlined_call_operand.hbm [shape: f32[2,32,256], index: 0, kind: input, shape index: {}]
  %s1 = inlined_call_operand.vmem [shape: f32[32,2], index: 1, kind: input, shape index: {}]
  %s2 = inlined_call_operand.vmem [shape: f32[1,2], index: 2, kind: input, shape index: {}]
  %s3 = inlined_call_operand.vmem [shape: f32[32,2], index: 3, kind: input, shape index: {}]
  %s4 = inlined_call_operand.vmem [shape: f32[32,1], index: 4, kind: input, shape index: {}]
  %s5 = inlined_call_operand.hbm [shape: f32[2,32,256], index: 5, kind: output, shape index: {}]
  %s6 = sld [smem:[#allocation0]]
  $region73: #{tpu_custom_call.1} parent=0
    _
  %s8 = ssub.s32 1, %s6
  %s9 = scalar_select 0, %s8, %s6
  $region1: #{tpu_custom_call.1} parent=0
    #allocation4 [shape = 'u8[65536]{0}', space=vmem, size = 0x10000, scoped, tag = 'input window, operand 0']
    #allocation5 [shape = 's32[2]{0}', space=sflag, size = 0x8, scoped, tag = 'scoped memory for tpu_custom_call.1']
    #allocation6 [shape = 's32[2]{0}', space=sflag, size = 0x8, scoped, tag = 'scoped memory for tpu_custom_call.1']
    #allocation7 [shape = 'u8[65536]{0}', space=vmem, size = 0x10000, scoped, tag = 'output window, operand 0']
    %10 = vsyncpa [#allocation5], 0
    %s11 = scalar_lea.sflag [#allocation5], 1
    %12 = vsyncpa %s11, 0
    %13 = vsyncpa [#allocation6], 0
    %s14 = scalar_lea.sflag [#allocation6], 1
    %15 = vsyncpa %s14, 0
    loop: start=0, step=1, limit=6
    $region2: #{tpu_custom_call.1} parent=1 // loop_pre_header
      _
    $region3: #{tpu_custom_call.1} parent=1 // loop_header
      %s17 = sphi 0, %s21
      %p18 = scmp.ge.s32.totalorder %s17, 6
      %s24 = sphi 0, %s43
      %s25 = sphi 0, %s39
      %s26 = sphi 0, %s35
      %s27 = sphi 0, %s24
      %s28 = sphi 0, %s25
      %s29 = sphi 0, %s26
      %s30 = sphi 0, %s27
      %s31 = sphi 0, %s28
      %s32 = sphi 0, %s29
      %s48 = sphi 0, %s50
      %s51 = sphi 0, %s48
      %s52 = sphi 0, %s51
      %s68 = sphi 0, %s52
      %s72 = sphi 0, %s72
      %s74 = sphi 0, %s72
      %s75 = sphi 0, %s74
      %s89 = sphi 0, %s75
      %s93 = sphi 0, %s93
      %s95 = sphi 0, %s93
      %s96 = sphi 0, %s95
      %s110 = sphi 0, %s96
      %s114 = sphi 0, %s114
      %s116 = sphi 0, %s114
      %s117 = sphi 0, %s116
      %s131 = sphi 0, %s117
      %s135 = sphi 0, %s135
      %s137 = sphi 0, %s135
      %s138 = sphi 0, %s137
      %s152 = sphi 0, %s138
      %s162 = sphi 0, %s164
      %s165 = sphi 0, %s162
      %s166 = sphi 0, %s165
      %s182 = sphi 0, %s166
    $region4: #{tpu_custom_call.1} parent=1 // loop_header_branch
      %20 = sbr.rel (%p18) target = $region8
    $region5: #{tpu_custom_call.1} parent=1 // loop_body
      %s22 = ssub.s32 %s17, 1
      %s23 = ssub.s32 %s17, 2
      %s33 = sadd.s32 1, %s26
      %p34 = scmp.ge.s32.totalorder %s33, 1
      %s35 = scalar_select %p34, 0, %s33
      %s36 = sadd.s32 1, %s25
      %s37 = scalar_select %p34, %s36, %s25
      %p38 = scmp.ge.s32.totalorder %s37, 2
      %s39 = scalar_select %p38, 0, %s37
      %s40 = sadd.s32 1, %s24
      %s41 = scalar_select %p38, %s40, %s24
      %p42 = scmp.ge.s32.totalorder %s41, 2
      %s43 = scalar_select %p42, 0, %s41
      %s44 = ssub.s32 %s24, %s43
      %s45 = ssub.s32 %s26, %s35
      %s46 = sor.u32 %s44, %s45
      %p47 = scmp.eq.s32.totalorder %s46, 0
      %s49 = sadd.s32 %s48, 1
      %s50 = scalar_select %p47, %s48, %s49
      %p53 = pneg %p47
      %p54 = scmp.eq.s32.totalorder %s17, 3
      %p55 = por %p53, %p54
      %p56 = scmp.ne.s32.totalorder %s48, %s51
      %p57 = scmp.eq.s32.totalorder %s17, 0
      %p58 = por %p56, %p57
      %p59 = scmp.ne.s32.totalorder %s48, %s51
      %p60 = scmp.eq.s32.totalorder %s22, 3
      %p61 = por %p59, %p60
      %p62 = scmp.ne.s32.totalorder %s51, %s52
      %p63 = scmp.eq.s32.totalorder %s22, 0
      %p64 = por %p62, %p63
      %p65 = scmp.ne.s32.totalorder %s51, %s52
      %p66 = scmp.eq.s32.totalorder %s23, 3
      %p67 = por %p65, %p66
      %p69 = scmp.ne.s32.totalorder %s52, %s68
      %p70 = scmp.eq.s32.totalorder %s23, 0
      %p71 = por %p69, %p70
      %s73 = sadd.s32 %s72, 1
      %p76 = scmp.eq.s32.totalorder %s17, 3
      %p77 = scmp.ne.s32.totalorder %s72, %s74
      %p78 = scmp.eq.s32.totalorder %s17, 0
      %p79 = por %p77, %p78
      %p80 = scmp.ne.s32.totalorder %s72, %s74
      %p81 = scmp.eq.s32.totalorder %s22, 3
      %p82 = por %p80, %p81
      %p83 = scmp.ne.s32.totalorder %s74, %s75
      %p84 = scmp.eq.s32.totalorder %s22, 0
      %p85 = por %p83, %p84
      %p86 = scmp.ne.s32.totalorder %s74, %s75
      %p87 = scmp.eq.s32.totalorder %s23, 3
      %p88 = por %p86, %p87
      %p90 = scmp.ne.s32.totalorder %s75, %s89
      %p91 = scmp.eq.s32.totalorder %s23, 0
      %p92 = por %p90, %p91
      %s94 = sadd.s32 %s93, 1
      %p97 = scmp.eq.s32.totalorder %s17, 3
      %p98 = scmp.ne.s32.totalorder %s93, %s95
      %p99 = scmp.eq.s32.totalorder %s17, 0
      %p100 = por %p98, %p99
      %p101 = scmp.ne.s32.totalorder %s93, %s95
      %p102 = scmp.eq.s32.totalorder %s22, 3
      %p103 = por %p101, %p102
      %p104 = scmp.ne.s32.totalorder %s95, %s96
      %p105 = scmp.eq.s32.totalorder %s22, 0
      %p106 = por %p104, %p105
      %p107 = scmp.ne.s32.totalorder %s95, %s96
      %p108 = scmp.eq.s32.totalorder %s23, 3
      %p109 = por %p107, %p108
      %p111 = scmp.ne.s32.totalorder %s96, %s110
      %p112 = scmp.eq.s32.totalorder %s23, 0
      %p113 = por %p111, %p112
      %s115 = sadd.s32 %s114, 1
      %p118 = scmp.eq.s32.totalorder %s17, 3
      %p119 = scmp.ne.s32.totalorder %s114, %s116
      %p120 = scmp.eq.s32.totalorder %s17, 0
      %p121 = por %p119, %p120
      %p122 = scmp.ne.s32.totalorder %s114, %s116
      %p123 = scmp.eq.s32.totalorder %s22, 3
      %p124 = por %p122, %p123
      %p125 = scmp.ne.s32.totalorder %s116, %s117
      %p126 = scmp.eq.s32.totalorder %s22, 0
      %p127 = por %p125, %p126
      %p128 = scmp.ne.s32.totalorder %s116, %s117
      %p129 = scmp.eq.s32.totalorder %s23, 3
      %p130 = por %p128, %p129
      %p132 = scmp.ne.s32.totalorder %s117, %s131
      %p133 = scmp.eq.s32.totalorder %s23, 0
      %p134 = por %p132, %p133
      %s136 = sadd.s32 %s135, 1
      %p139 = scmp.eq.s32.totalorder %s17, 3
      %p140 = scmp.ne.s32.totalorder %s135, %s137
      %p141 = scmp.eq.s32.totalorder %s17, 0
      %p142 = por %p140, %p141
      %p143 = scmp.ne.s32.totalorder %s135, %s137
      %p144 = scmp.eq.s32.totalorder %s22, 3
      %p145 = por %p143, %p144
      %p146 = scmp.ne.s32.totalorder %s137, %s138
      %p147 = scmp.eq.s32.totalorder %s22, 0
      %p148 = por %p146, %p147
      %p149 = scmp.ne.s32.totalorder %s137, %s138
      %p150 = scmp.eq.s32.totalorder %s23, 3
      %p151 = por %p149, %p150
      %p153 = scmp.ne.s32.totalorder %s138, %s152
      %p154 = scmp.eq.s32.totalorder %s23, 0
      %p155 = por %p153, %p154
      %s156 = smul.u32 %s25, %s26
      %s157 = smul.u32 %s39, %s35
      %s158 = ssub.s32 %s24, %s43
      %s159 = ssub.s32 %s156, %s157
      %s160 = sor.u32 %s158, %s159
      %p161 = scmp.eq.s32.totalorder %s160, 0
      %s163 = sadd.s32 %s162, 1
      %s164 = scalar_select %p161, %s162, %s163
      %p167 = pneg %p161
      %p168 = scmp.eq.s32.totalorder %s17, 3
      %p169 = por %p167, %p168
      %p170 = scmp.ne.s32.totalorder %s162, %s165
      %p171 = scmp.eq.s32.totalorder %s17, 0
      %p172 = por %p170, %p171
      %p173 = scmp.ne.s32.totalorder %s162, %s165
      %p174 = scmp.eq.s32.totalorder %s22, 3
      %p175 = por %p173, %p174
      %p176 = scmp.ne.s32.totalorder %s165, %s166
      %p177 = scmp.eq.s32.totalorder %s22, 0
      %p178 = por %p176, %p177
      %p179 = scmp.ne.s32.totalorder %s165, %s166
      %p180 = scmp.eq.s32.totalorder %s23, 3
      %p181 = por %p179, %p180
      %p183 = scmp.ne.s32.totalorder %s166, %s182
      %p184 = scmp.eq.s32.totalorder %s23, 0
      %p185 = por %p183, %p184
      %p186 = scmp.le.s32.totalorder 1, %s17
      %p187 = scmp.lt.s32.totalorder %s17, 5
      %p188 = pnand %p186, %p187
      %p189 = pneg %p188
      // Predicated region
      $region9: #{tpu_custom_call.1} parent=5 // pred_check
        _
      $region10: #{tpu_custom_call.1} parent=5 // pred_check_branch
        %191 = sbr.rel (%p188) target = $region12
      $region11: #{tpu_custom_call.1} parent=5 // pred_region
        %s192 = ssub.s32 %s17, 1
        // Predicated region
        $region13: #{tpu_custom_call.1} parent=11 // pred_check
          %p193 = pneg %p85
        $region14: #{tpu_custom_call.1} parent=11 // pred_check_branch
          %195 = sbr.rel (%p193) target = $region16
        $region15: #{tpu_custom_call.1} parent=11 // pred_region
          _
        $region16: #{tpu_custom_call.1} parent=11 // pred_fallthru
          _
        // Predicated region
        $region17: #{tpu_custom_call.1} parent=11 // pred_check
          %p196 = pneg %p106
        $region18: #{tpu_custom_call.1} parent=11 // pred_check_branch
          %198 = sbr.rel (%p196) target = $region20
        $region19: #{tpu_custom_call.1} parent=11 // pred_region
          _
        $region20: #{tpu_custom_call.1} parent=11 // pred_fallthru
          _
        // Predicated region
        $region21: #{tpu_custom_call.1} parent=11 // pred_check
          %p199 = pneg %p127
        $region22: #{tpu_custom_call.1} parent=11 // pred_check_branch
          %201 = sbr.rel (%p199) target = $region24
        $region23: #{tpu_custom_call.1} parent=11 // pred_region
          _
        $region24: #{tpu_custom_call.1} parent=11 // pred_fallthru
          _
        // Predicated region
        $region25: #{tpu_custom_call.1} parent=11 // pred_check
          %p202 = pneg %p148
        $region26: #{tpu_custom_call.1} parent=11 // pred_check_branch
          %204 = sbr.rel (%p202) target = $region28
        $region27: #{tpu_custom_call.1} parent=11 // pred_region
          _
        $region28: #{tpu_custom_call.1} parent=11 // pred_fallthru
          _
      $region12: #{tpu_custom_call.1} parent=5 // pred_fallthru
        _
      %p205 = scmp.lt.s32.totalorder %s17, 4
      // Predicated region
      $region29: #{tpu_custom_call.1} parent=5 // pred_check
        %p206 = pneg %p205
      $region30: #{tpu_custom_call.1} parent=5 // pred_check_branch
        %208 = sbr.rel (%p206) target = $region32
      $region31: #{tpu_custom_call.1} parent=5 // pred_region
        // Predicated region
        $region33: #{tpu_custom_call.1} parent=31 // pred_check
          %p209 = pneg %p58
        $region34: #{tpu_custom_call.1} parent=31 // pred_check_branch
          %211 = sbr.rel (%p209) target = $region36
        $region35: #{tpu_custom_call.1} parent=31 // pred_region
          %s212 = sand.u32 %s48, 1
          %s213 = scalar_lea.sflag [#allocation5], %s212
          %s214 = sand.u32 %s48, 1
          %s215 = smul.addr %s214, 64
          %s216 = scalar_lea.vmem [#allocation4], %s215
          %s217 = smul.u32 2, %s26
          %s219 = ssub.s32 1024, 1024
          %220 = vsyncadd %s213, %s219
          %s221 = smul.addr %s24, 8
          %s222 = sadd.s32 %s217, %s221
          %s223 = smul.addr %s222, 128
          %s224 = scalar_lea.hbm %s0, %s223
          %s225 = sshll.u32 %s216, 4
          %s226 = int_to_ptr.vmem [resolvable:$true] %s225
          %231 = dma.hbm_to_vmem [thread:$0]  %s224, 1024, %s226, %s213, 256, 256, 16
        $region36: #{tpu_custom_call.1} parent=31 // pred_fallthru
          _
      $region32: #{tpu_custom_call.1} parent=5 // pred_fallthru
        _
      %p232 = scmp.le.s32.totalorder 1, %s17
      %p233 = scmp.lt.s32.totalorder %s17, 5
      %p234 = pnand %p232, %p233
      %p235 = pneg %p234
      // Predicated region
      $region37: #{tpu_custom_call.1} parent=5 // pred_check
        _
      $region38: #{tpu_custom_call.1} parent=5 // pred_check_branch
        %237 = sbr.rel (%p234) target = $region40
      $region39: #{tpu_custom_call.1} parent=5 // pred_region
        %s238 = ssub.s32 %s17, 1
        %s239 = sand.u32 %s51, 1
        %s240 = scalar_lea.sflag [#allocation5], %s239
        %s241 = sand.u32 %s51, 1
        %s242 = smul.addr %s241, 64
        %s243 = scalar_lea.vmem [#allocation4], %s242
        // Predicated region
        $region41: #{tpu_custom_call.1} parent=39 // pred_check
          %p244 = pneg %p64
        $region42: #{tpu_custom_call.1} parent=39 // pred_check_branch
          %246 = sbr.rel (%p244) target = $region44
        $region43: #{tpu_custom_call.1} parent=39 // pred_region
          %247 = dma.done %s240, 1024
        $region44: #{tpu_custom_call.1} parent=39 // pred_fallthru
          _
        %s248 = sand.u32 %s51, 1
        %s249 = scalar_lea.sflag [#allocation5], %s248
        %s250 = sand.u32 %s51, 1
        %s251 = smul.addr %s250, 64
        %s252 = scalar_lea.vmem [#allocation4], %s251
        %p253 = pneg %p64
        %p254 = pneg %p61
        %p255 = pneg %p85
        %p256 = pneg %p82
        %p257 = pneg %p106
        %p258 = pneg %p103
        %p259 = pneg %p127
        %p260 = pneg %p124
        %p261 = pneg %p148
        %p262 = pneg %p145
        %p263 = pneg %p178
        %p264 = pneg %p175
        %s265 = sand.u32 %s165, 1
        %s266 = scalar_lea.sflag [#allocation6], %s265
        %s267 = sand.u32 %s165, 1
        %s268 = smul.addr %s267, 64
        %s269 = scalar_lea.vmem [#allocation7], %s268
        %s270 = smul.u32 2, %s29
        %s271 = smul.u32 %s28, %s29
        %s272 = smul.u32 2, %s271
        %p273 = scmp.eq.s32.totalorder %s28, 0
        // Predicated region
        $region45: #{tpu_custom_call.1} parent=39 // pred_check
          %p274 = pneg %p273
        $region46: #{tpu_custom_call.1} parent=39 // pred_check_branch
          %276 = sbr.rel (%p274) target = $region48
        $region47: #{tpu_custom_call.1} parent=39 // pred_region
          %p277 = scmp.eq.s32.totalorder %s29, 0
          // Predicated region
          $region49: #{tpu_custom_call.1} parent=47 // pred_check
            %p278 = pneg %p277
          $region50: #{tpu_custom_call.1} parent=47 // pred_check_branch
            %280 = sbr.rel (%p278) target = $region52
          $region51: #{tpu_custom_call.1} parent=47 // pred_region
            %vm281 = vcmask 7168
            %282 = vst.msk [vmem:[#allocation2] sm:$0xff] %vm281, 0.0
            %283 = vst.msk [vmem:[#allocation2 + $0x8] sm:$0xff] %vm281, 0.0
            %284 = vst.msk [vmem:[#allocation2 + $0x10] sm:$0xff] %vm281, 0.0
            %285 = vst.msk [vmem:[#allocation2 + $0x18] sm:$0xff] %vm281, 0.0
          $region52: #{tpu_custom_call.1} parent=47 // pred_fallthru
            _
          %v286 = vld [vmem:[%s243] sm:$0xff]
          %v287 = vld [vmem:[%s243 + $0x8] sm:$0xff]
          %v288 = vld [vmem:[%s243 + $0x10] sm:$0xff]
          %v289 = vld [vmem:[%s243 + $0x18] sm:$0xff]
          %v290 = vld [vmem:[%s243 + $0x20] sm:$0xff]
          %v291 = vld [vmem:[%s243 + $0x28] sm:$0xff]
          %v292 = vld [vmem:[%s243 + $0x30] sm:$0xff]
          %v293 = vld [vmem:[%s243 + $0x38] sm:$0xff]
          %v294 = vld [vmem:[#allocation2] sm:$0xff]
          %v295 = vld [vmem:[#allocation2 + $0x8] sm:$0xff]
          %v296 = vld [vmem:[#allocation2 + $0x10] sm:$0xff]
          %v297 = vld [vmem:[#allocation2 + $0x18] sm:$0xff]
          %v298 = vadd.f32 %v286, %v287
          %299 = vadd.xlane.f32.xlu0 %v298
          %v300 = vpop.xlane.xlu0 %299
          %v301 = vadd.f32 %v288, %v289
          %302 = vadd.xlane.f32.xlu0 %v301
          %v303 = vpop.xlane.xlu0 %302
          %v304 = vadd.f32 %v290, %v291
          %305 = vadd.xlane.f32.xlu0 %v304
          %v306 = vpop.xlane.xlu0 %305
          %v307 = vadd.f32 %v292, %v293
          %308 = vadd.xlane.f32.xlu0 %v307
          %v309 = vpop.xlane.xlu0 %308
          %v310 = vadd.f32 %v294, %v300
          %v311 = vadd.f32 %v295, %v303
          %v312 = vadd.f32 %v296, %v306
          %v313 = vadd.f32 %v297, %v309
          %vm314 = vcmask 7168
          %315 = vst.msk [vmem:[#allocation2] sm:$0xff] %vm314, %v310
          %316 = vst.msk [vmem:[#allocation2 + $0x8] sm:$0xff] %vm314, %v311
          %317 = vst.msk [vmem:[#allocation2 + $0x10] sm:$0xff] %vm314, %v312
          %318 = vst.msk [vmem:[#allocation2 + $0x18] sm:$0xff] %vm314, %v313
          // Predicated region
          $region53: #{tpu_custom_call.1} parent=47 // pred_check
            %p319 = pneg %p277
          $region54: #{tpu_custom_call.1} parent=47 // pred_check_branch
            %321 = sbr.rel (%p319) target = $region56
          $region55: #{tpu_custom_call.1} parent=47 // pred_region
            %v322 = vld [vmem:[#allocation2] sm:$0xff]
            %v323 = vld [vmem:[#allocation2 + $0x8] sm:$0xff]
            %v324 = vld [vmem:[#allocation2 + $0x10] sm:$0xff]
            %v325 = vld [vmem:[#allocation2 + $0x18] sm:$0xff]
            %v326 = vmul.f32 %v322, 0.00390625
            %v327 = vmul.f32 %v323, 0.00390625
            %v328 = vmul.f32 %v324, 0.00390625
            %v329 = vmul.f32 %v325, 0.00390625
            %v330 = vld [vmem:[%s1] sm:$0xff]
            %v331 = vld [vmem:[%s1 + $0x8] sm:$0xff]
            %v332 = vld [vmem:[%s1 + $0x10] sm:$0xff]
            %v333 = vld [vmem:[%s1 + $0x18] sm:$0xff]
            %335 = vset.pattern.permute.xlu0 0
            %336 = vperm.xlu0 %335, %v326
            %v337 = vpop.permute.xlu0 %336
            %340 = vset.pattern.permute.xlu0 0
            %341 = vperm.xlu0 %340, %v327
            %v342 = vpop.permute.xlu0 %341
            %345 = vset.pattern.permute.xlu0 0
            %346 = vperm.xlu0 %345, %v328
            %v347 = vpop.permute.xlu0 %346
            %350 = vset.pattern.permute.xlu0 0
            %351 = vperm.xlu0 %350, %v329
            %v352 = vpop.permute.xlu0 %351
            %v354 = vmul.f32 %v330, %v337
            %v355 = vmul.f32 %v331, %v342
            %v356 = vmul.f32 %v332, %v347
            %v357 = vmul.f32 %v333, %v352
            %vm358 = vcmask 15360
            %v359 = vsel %vm358, %v354, 0.0
            %v360 = vsel %vm358, %v355, 0.0
            %v361 = vadd.f32 %v359, %v360
            %v362 = vsel %vm358, %v356, 0.0
            %v363 = vadd.f32 %v361, %v362
            %v364 = vsel %vm358, %v357, 0.0
            %v365 = vadd.f32 %v363, %v364
            %v366 = vrot.slane %v365, 4
            %v367 = vadd.f32 %v365, %v366
            %v368 = vrot.slane %v367, 2
            %v369 = vadd.f32 %v367, %v368
            %v370 = vrot.slane %v369, 1
            %v371 = vadd.f32 %v369, %v370
            %v372 = vld [vmem:[%s2] sm:$0x1]
            %v373 = vadd.f32 %v371, %v372
            %v374 = vmax.f32 %v373, 0.0
            %v375 = vld [vmem:[%s3] sm:$0xff]
            %v376 = vld [vmem:[%s3 + $0x8] sm:$0xff]
            %v377 = vld [vmem:[%s3 + $0x10] sm:$0xff]
            %v378 = vld [vmem:[%s3 + $0x18] sm:$0xff]
            %v379 = vlaneseq
            %v380 = vshrl.u32 %v379, 7
            %v381 = vsub.s32 0, %v380
            %v382 = vrot.slane %v374, %v381
            %v383 = vmul.f32 %v375, %v382
            %v384 = vmul.f32 %v376, %v382
            %v385 = vmul.f32 %v377, %v382
            %v386 = vmul.f32 %v378, %v382
            %v387 = vsel %vm358, %v383, 0.0
            %388 = vadd.xlane.f32.xlu0 %v387
            %v389 = vpop.xlane.xlu0 %388
            %v390 = vsel %vm358, %v384, 0.0
            %391 = vadd.xlane.f32.xlu0 %v390
            %v392 = vpop.xlane.xlu0 %391
            %v393 = vsel %vm358, %v385, 0.0
            %394 = vadd.xlane.f32.xlu0 %v393
            %v395 = vpop.xlane.xlu0 %394
            %v396 = vsel %vm358, %v386, 0.0
            %397 = vadd.xlane.f32.xlu0 %v396
            %v398 = vpop.xlane.xlu0 %397
            %v399 = vld [vmem:[%s4] sm:$0xff]
            %v400 = vld [vmem:[%s4 + $0x8] sm:$0xff]
            %v401 = vld [vmem:[%s4 + $0x10] sm:$0xff]
            %v402 = vld [vmem:[%s4 + $0x18] sm:$0xff]
            %v403 = vadd.f32 %v389, %v399
            %v404 = vadd.f32 %v392, %v400
            %v405 = vadd.f32 %v395, %v401
            %v406 = vadd.f32 %v398, %v402
            %v407 = vxor.u32 %v403, 2147483648
            %v408 = vxor.u32 %v404, 2147483648
            %v409 = vxor.u32 %v405, 2147483648
            %v410 = vxor.u32 %v406, 2147483648
            %v411 = vmul.f32 %v407, 1.442695
            %v412 = vpow.pop %v411
            %v413 = vmul.f32 %v408, 1.442695
            %v414 = vpow.pop %v413
            %v415 = vmul.f32 %v409, 1.442695
            %v416 = vpow.pop %v415
            %v417 = vmul.f32 %v410, 1.442695
            %v418 = vpow.pop %v417
            %v419 = vadd.f32 %v412, 1.0
            %v420 = vadd.f32 %v414, 1.0
            %v421 = vadd.f32 %v416, 1.0
            %v422 = vadd.f32 %v418, 1.0
            %v423 = vrcp.pop %v419
            %v424 = vmul.f32 1.0, %v423
            %v425 = vrcp.pop %v420
            %v426 = vmul.f32 1.0, %v425
            %v427 = vrcp.pop %v421
            %v428 = vmul.f32 1.0, %v427
            %v429 = vrcp.pop %v422
            %v430 = vmul.f32 1.0, %v429
            %431 = vst.msk [vmem:[#allocation3] sm:$0xff] %vm314, %v424
            %432 = vst.msk [vmem:[#allocation3 + $0x8] sm:$0xff] %vm314, %v426
            %433 = vst.msk [vmem:[#allocation3 + $0x10] sm:$0xff] %vm314, %v428
            %434 = vst.msk [vmem:[#allocation3 + $0x18] sm:$0xff] %vm314, %v430
          $region56: #{tpu_custom_call.1} parent=47 // pred_fallthru
            _
        $region48: #{tpu_custom_call.1} parent=39 // pred_fallthru
          _
        %p435 = scmp.eq.s32.totalorder %s28, 1
        // Predicated region
        $region57: #{tpu_custom_call.1} parent=39 // pred_check
          %p436 = pneg %p435
        $region58: #{tpu_custom_call.1} parent=39 // pred_check_branch
          %438 = sbr.rel (%p436) target = $region60
        $region59: #{tpu_custom_call.1} parent=39 // pred_region
          %v439 = vld [vmem:[%s243] sm:$0xff]
          %v440 = vld [vmem:[%s243 + $0x8] sm:$0xff]
          %v441 = vld [vmem:[%s243 + $0x10] sm:$0xff]
          %v442 = vld [vmem:[%s243 + $0x18] sm:$0xff]
          %v443 = vld [vmem:[%s243 + $0x20] sm:$0xff]
          %v444 = vld [vmem:[%s243 + $0x28] sm:$0xff]
          %v445 = vld [vmem:[%s243 + $0x30] sm:$0xff]
          %v446 = vld [vmem:[%s243 + $0x38] sm:$0xff]
          %v447 = vld [vmem:[#allocation3] sm:$0xff]
          %v448 = vld [vmem:[#allocation3 + $0x8] sm:$0xff]
          %v449 = vld [vmem:[#allocation3 + $0x10] sm:$0xff]
          %v450 = vld [vmem:[#allocation3 + $0x18] sm:$0xff]
          %452 = vset.pattern.permute.xlu0 0
          %453 = vperm.xlu0 %452, %v447
          %v454 = vpop.permute.xlu0 %453
          %457 = vset.pattern.permute.xlu0 0
          %458 = vperm.xlu0 %457, %v448
          %v459 = vpop.permute.xlu0 %458
          %462 = vset.pattern.permute.xlu0 0
          %463 = vperm.xlu0 %462, %v449
          %v464 = vpop.permute.xlu0 %463
          %467 = vset.pattern.permute.xlu0 0
          %468 = vperm.xlu0 %467, %v450
          %v469 = vpop.permute.xlu0 %468
          %v471 = vmul.f32 %v439, %v454
          %v472 = vmul.f32 %v440, %v454
          %v473 = vmul.f32 %v441, %v459
          %v474 = vmul.f32 %v442, %v459
          %v475 = vmul.f32 %v443, %v464
          %v476 = vmul.f32 %v444, %v464
          %v477 = vmul.f32 %v445, %v469
          %v478 = vmul.f32 %v446, %v469
          %479 = vst [vmem:[%s269] sm:$0xff] %v471
          %480 = vst [vmem:[%s269 + $0x8] sm:$0xff] %v472
          %481 = vst [vmem:[%s269 + $0x10] sm:$0xff] %v473
          %482 = vst [vmem:[%s269 + $0x18] sm:$0xff] %v474
          %483 = vst [vmem:[%s269 + $0x20] sm:$0xff] %v475
          %484 = vst [vmem:[%s269 + $0x28] sm:$0xff] %v476
          %485 = vst [vmem:[%s269 + $0x30] sm:$0xff] %v477
          %486 = vst [vmem:[%s269 + $0x38] sm:$0xff] %v478
        $region60: #{tpu_custom_call.1} parent=39 // pred_fallthru
          _
        %s487 = sand.u32 %s165, 1
        %s488 = scalar_lea.sflag [#allocation6], %s487
        %s489 = sand.u32 %s165, 1
        %s490 = smul.addr %s489, 64
        %s491 = scalar_lea.vmem [#allocation7], %s490
        // Predicated region
        $region61: #{tpu_custom_call.1} parent=39 // pred_check
          %p492 = pneg %p175
        $region62: #{tpu_custom_call.1} parent=39 // pred_check_branch
          %494 = sbr.rel (%p492) target = $region64
        $region63: #{tpu_custom_call.1} parent=39 // pred_region
          %s495 = smul.u32 %s28, %s29
          %s496 = smul.u32 2, %s495
          %s498 = ssub.s32 1024, 1024
          %499 = vsyncadd %s488, %s498
          %s500 = smul.addr %s27, 8
          %s501 = sadd.s32 %s496, %s500
          %s502 = smul.addr %s501, 128
          %s503 = scalar_lea.hbm %s5, %s502
          %s504 = sshll.u32 %s491, 4
          %s505 = int_to_ptr.vmem [resolvable:$true] %s504
          %510 = dma.vmem_to_hbm [thread:$0]  %s505, 1024, %s503, %s488, 256, 256, 16
        $region64: #{tpu_custom_call.1} parent=39 // pred_fallthru
          _
      $region40: #{tpu_custom_call.1} parent=5 // pred_fallthru
        _
      %p511 = scmp.le.s32.totalorder 2, %s17
      // Predicated region
      $region65: #{tpu_custom_call.1} parent=5 // pred_check
        %p512 = pneg %p511
      $region66: #{tpu_custom_call.1} parent=5 // pred_check_branch
        %514 = sbr.rel (%p512) target = $region68
      $region67: #{tpu_custom_call.1} parent=5 // pred_region
        %s515 = ssub.s32 %s17, 2
        // Predicated region
        $region69: #{tpu_custom_call.1} parent=67 // pred_check
          %p516 = pneg %p181
        $region70: #{tpu_custom_call.1} parent=67 // pred_check_branch
          %518 = sbr.rel (%p516) target = $region72
        $region71: #{tpu_custom_call.1} parent=67 // pred_region
          %s519 = sand.u32 %s166, 1
          %s520 = scalar_lea.sflag [#allocation6], %s519
          %s521 = sand.u32 %s166, 1
          %s522 = smul.addr %s521, 64
          %s523 = scalar_lea.vmem [#allocation7], %s522
          %524 = dma.done %s520, 1024
        $region72: #{tpu_custom_call.1} parent=67 // pred_fallthru
          _
      $region68: #{tpu_custom_call.1} parent=5 // pred_fallthru
        _
    $region6: #{tpu_custom_call.1} parent=1 // loop_footer
      %s21 = sadd.s32 1, %s17
    $region7: #{tpu_custom_call.1} parent=1 // loop_footer_branch
      %16 = sbr.rel target = $region3
    $region8: #{tpu_custom_call.1} parent=1 // loop_exit
      _
    %525 = vsyncpa [#allocation5], 1
    %s526 = scalar_lea.sflag [#allocation5], 1
    %527 = vsyncpa %s526, 1
    %528 = vsyncpa [#allocation6], 1
    %s529 = scalar_lea.sflag [#allocation6], 1
    %530 = vsyncpa %s529, 1

</llo_original>
